<compile_context>
chip_gen: v7x
topology: tpu7x:2x2x1
jax: 0.10.0
libtpu: 0.0.40
codegen_flags: <defaults>
</compile_context>

<pallas_src>
import functools
import math

import jax
import jax.numpy as jnp
from jax.experimental import pallas as pl
from jax.experimental.pallas import tpu as pltpu


def _round_up(x, m):
    return (x + m - 1) // m * m


def _pick_tile(dim_aligned, cap, align):
    """Largest tile <= cap that equals or divides the (already aligned) dim, as a
    multiple of `align`, so we never pad past (8,128) alignment unless unavoidable."""
    cap = max(align, (cap // align) * align)
    if dim_aligned <= cap:
        return dim_aligned
    t = cap
    while t >= align:
        if dim_aligned % t == 0:
            return t
        t -= align
    return cap  # fallback: caller pads up to a tile multiple


def _device_tile_config():
    """Generation-specific tile caps + scoped-VMEM limit."""
    kind = ""
    try:
        kind = jax.devices()[0].device_kind.lower()
    except Exception:
        pass
    if "v5 lite" in kind or "v5e" in kind or "v5litepod" in kind:
        # v5e: 4x128x128 MXU, 16 MiB scoped default -> keep footprint small.
        return dict(tm_max=512, tn_max=512, tk_max=1024, vmem_limit=None)
    if "v7" in kind or "tpu7" in kind:
        # v7x: 64 MiB VMEM per TC -> cap double-buffered footprint well under it.
        return dict(tm_max=1024, tn_max=1024, tk_max=1024, vmem_limit=48 << 20)
    if "v6" in kind:
        # v6e: 128 MiB physical VMEM, raise the 32 MiB scoped default.
        return dict(tm_max=1024, tn_max=2048, tk_max=2048, vmem_limit=96 << 20)
    # v4 / v5p / unknown: moderate tiles, leave the scoped default alone.
    return dict(tm_max=512, tn_max=1024, tk_max=1024, vmem_limit=None)


@functools.lru_cache(maxsize=None)
def _make_linear_kernel(has_bias: bool, use_scratch: bool):
    """Build the kernel body for one (tm, tn) output tile reduced over the K axis."""
    if use_scratch:
        # Narrow output dtype: f32 VMEM scratch accumulator + cast epilogue.
        def kernel(*refs):
            if has_bias:
                x_ref, w_ref, b_ref, o_ref, acc_ref = refs
            else:
                x_ref, w_ref, o_ref, acc_ref = refs
                b_ref = None
            k = pl.program_id(2)

            @pl.when(k == 0)
            def _():
                acc_ref[...] = jnp.zeros_like(acc_ref)

            acc_ref[...] += jax.lax.dot_general(
                x_ref[...], w_ref[...],
                dimension_numbers=(((1,), (0,)), ((), ())),  # lane-dense MXU result
                preferred_element_type=jnp.float32)

            @pl.when(k == pl.num_programs(2) - 1)
            def _():
                r = acc_ref[...]
                if has_bias:
                    r = r + b_ref[...].astype(jnp.float32)
                o_ref[...] = r.astype(o_ref.dtype)
    else:
        # float32 output: accumulate directly into o_ref (no scratch, no epilogue
        # copy); the bias is folded into the k == 0 initialization.
        def kernel(*refs):
            if has_bias:
                x_ref, w_ref, b_ref, o_ref = refs
            else:
                x_ref, w_ref, o_ref = refs
                b_ref = None
            k = pl.program_id(2)

            @pl.when(k == 0)
            def _():
                if has_bias:
                    o_ref[...] = jnp.broadcast_to(
                        b_ref[...].astype(o_ref.dtype), o_ref.shape)
                else:
                    o_ref[...] = jnp.zeros_like(o_ref)

            o_ref[...] += jax.lax.dot_general(
                x_ref[...], w_ref[...],
                dimension_numbers=(((1,), (0,)), ((), ())),
                preferred_element_type=jnp.float32)
    return kernel


def prepare_linear_norm_params(weight, bias=None, *, compute_dtype=None):
    """One-time (off hot path) weight prep: transpose to (in_dim, out_dim) so the
    output is lane-dense, cast to the MXU compute dtype, and pad to (8,128)
    alignment.  weight: (out_dim, in_dim) PyTorch layout.

    Returns (w_t, b2d, out_dim):
      w_t: (round_up(in_dim,128), round_up(out_dim,128)) in compute_dtype
      b2d: (1, round_up(out_dim,128)) float32, or None
    """
    out_dim, in_dim = weight.shape
    if compute_dtype is None:
        compute_dtype = weight.dtype
    k_al = _round_up(in_dim, 128)
    n_al = _round_up(out_dim, 128)
    w_t = weight.T.astype(compute_dtype)
    if (k_al, n_al) != (in_dim, out_dim):
        w_t = jnp.pad(w_t, ((0, k_al - in_dim), (0, n_al - out_dim)))
    b2d = None
    if bias is not None:
        b2d = bias.reshape(1, out_dim).astype(jnp.float32)
        if n_al != out_dim:
            b2d = jnp.pad(b2d, ((0, 0), (0, n_al - out_dim)))
    return w_t, b2d, out_dim


def linear_norm_prepared(x, w_t, b2d, out_dim, *, out_dtype=None,
                         tm_max=None, tn_max=None, tk_max=None,
                         vmem_limit_bytes=None, weight_buffers=2):
    """Hot-path linear: x (..., in_dim) @ prepared weight, + optional bias.

    w_t / b2d come from prepare_linear_norm_params(); out_dim is a static int.
    """
    *lead, in_dim = x.shape
    k_al, n_al = w_t.shape
    if k_al != _round_up(in_dim, 128) or n_al < out_dim or n_al % 128 != 0:
        raise ValueError("prepared weight shape does not match x / out_dim")

    compute_dtype = w_t.dtype
    if out_dtype is None:
        out_dtype = x.dtype
    out_dtype = jnp.dtype(out_dtype)

    m = int(math.prod(lead)) if lead else 1
    m_al = _round_up(max(m, 1), 8)

    cfg = _device_tile_config()
    tm_max = tm_max if tm_max is not None else cfg["tm_max"]
    tn_max = tn_max if tn_max is not None else cfg["tn_max"]
    tk_max = tk_max if tk_max is not None else cfg["tk_max"]
    if vmem_limit_bytes is None:
        vmem_limit_bytes = cfg["vmem_limit"]

    # Tiles that divide the aligned dims whenever possible -> no extra pad copies.
    tm = _pick_tile(m_al, tm_max, 8)
    tk = _pick_tile(k_al, tk_max, 128)
    tn = _pick_tile(n_al, tn_max, 128)

    m_pad = _round_up(m_al, tm)
    k_pad = _round_up(k_al, tk)
    n_pad = _round_up(n_al, tn)

    x2d = x.reshape(m, in_dim).astype(compute_dtype)
    if (m_pad, k_pad) != (m, in_dim):
        x2d = jnp.pad(x2d, ((0, m_pad - m), (0, k_pad - in_dim)))
    if (k_pad, n_pad) != (k_al, n_al):          # rare: only when no tile divides
        w_t = jnp.pad(w_t, ((0, k_pad - k_al), (0, n_pad - n_al)))
        if b2d is not None:
            b2d = jnp.pad(b2d, ((0, 0), (0, n_pad - n_al)))

    has_bias = b2d is not None
    use_scratch = out_dtype != jnp.dtype(jnp.float32)
    kernel = _make_linear_kernel(has_bias, use_scratch)

    grid = (m_pad // tm, n_pad // tn, k_pad // tk)
    gi, gj, gk = grid

    in_specs = [pl.BlockSpec((tm, tk), lambda i, j, k: (i, k))]   # activations
    if weight_buffers and weight_buffers > 2:
        in_specs.append(pl.BlockSpec((tk, tn), lambda i, j, k: (k, j),
                                     pipeline_mode=pl.Buffered(weight_buffers)))
    else:
        in_specs.append(pl.BlockSpec((tk, tn), lambda i, j, k: (k, j)))  # weight
    operands = [x2d, w_t]
    if has_bias:
        in_specs.append(pl.BlockSpec((1, tn), lambda i, j, k: (0, j)))
        operands.append(b2d)

    # Cost estimate including tile re-reads under this (i, j, k) schedule.
    in_b = jnp.dtype(compute_dtype).itemsize
    out_b = out_dtype.itemsize
    bytes_accessed = ((m_pad * k_pad * in_b) * gj
                      + (k_pad * n_pad * in_b) * gi
                      + m_pad * n_pad * out_b
                      + (n_pad * 4 * gi if has_bias else 0))
    cost = pl.CostEstimate(flops=2 * m_pad * k_pad * n_pad,
                           transcendentals=0,
                           bytes_accessed=bytes_accessed)

    out = pl.pallas_call(
        kernel,
        out_shape=jax.ShapeDtypeStruct((m_pad, n_pad), out_dtype),
        grid_spec=pltpu.PrefetchScalarGridSpec(
            num_scalar_prefetch=0,
            grid=grid,
            in_specs=in_specs,
            out_specs=pl.BlockSpec((tm, tn), lambda i, j, k: (i, j)),
            scratch_shapes=(tuple([pltpu.VMEM((tm, tn), jnp.float32)])
                            if use_scratch else ()),
        ),
        compiler_params=pltpu.CompilerParams(
            dimension_semantics=("parallel", "parallel", "arbitrary"),
            vmem_limit_bytes=vmem_limit_bytes,
        ),
        cost_estimate=cost,
    )(*operands)

    out = out[:m, :out_dim]
    return out.reshape(*lead, out_dim)


def linear_norm(x, weight, bias=None, *, compute_dtype=None, out_dtype=None, **kw):
    """Convenience entry (prepares the weight per call).

    NOTE: for repeated calls with a static weight, call prepare_linear_norm_params()
    once and use linear_norm_prepared() so the transpose/cast/pad stays off the hot
    path.  compute_dtype=jnp.bfloat16 (operands only, f32 accumulation) reaches MXU
    peak on v5e/v6e/v7x; the f32 default is kept for exactness.
    """
    if compute_dtype is None:
        compute_dtype = x.dtype
    w_t, b2d, out_dim = prepare_linear_norm_params(
        weight, bias, compute_dtype=compute_dtype)
    return linear_norm_prepared(x, w_t, b2d, out_dim, out_dtype=out_dtype, **kw)


def init_linear_norm_params(key, in_dim, out_dim, w_init_gain="linear"):
    """Mirror the PyTorch module init: xavier_uniform_ weight (gain from
    calculate_gain), default nn.Linear bias init."""
    kw, kb = jax.random.split(key)
    gain = 1.0  # calculate_gain('linear') == 1.0
    a = gain * math.sqrt(6.0 / (in_dim + out_dim))
    weight = jax.random.uniform(kw, (out_dim, in_dim), jnp.float32, -a, a)
    bound = 1.0 / math.sqrt(in_dim)
    bias = jax.random.uniform(kb, (out_dim,), jnp.float32, -bound, bound)
    return weight, bias


if __name__ == "__main__":
    key = jax.random.PRNGKey(0)
    k_x, k_p = jax.random.split(key)

    batch, seq, in_dim, out_dim = 2, 8, 32, 64
    x = jax.random.normal(k_x, (batch, seq, in_dim), jnp.float32)
    weight, bias = init_linear_norm_params(k_p, in_dim, out_dim)
    y_ref = x @ weight.T + bias

    # 1) f32 path via the convenience wrapper (exact vs reference).
    y = jax.block_until_ready(linear_norm(x, weight, bias))
    assert y.shape == (batch, seq, out_dim) and y.dtype == jnp.float32
    assert jnp.allclose(y, y_ref, atol=1e-5, rtol=1e-5)

    # 2) Hot path: weight prepared once (pre-transposed / padded, bf16 operands),
    #    f32 accumulation, f32 output (no-scratch kernel variant).
    w_t, b2d, od = prepare_linear_norm_params(weight, bias, compute_dtype=jnp.bfloat16)
    y_bf = jax.block_until_ready(
        linear_norm_prepared(x, w_t, b2d, od, out_dtype=jnp.float32))
    assert y_bf.dtype == jnp.float32
    assert jnp.allclose(y_bf, y_ref, atol=5e-2, rtol=5e-2)

    # 3) bf16 output path (exercises the f32-scratch + cast-epilogue variant).
    y_bf_out = jax.block_until_ready(
        linear_norm_prepared(x, w_t, b2d, od, out_dtype=jnp.bfloat16))
    assert y_bf_out.dtype == jnp.bfloat16
    assert jnp.allclose(y_bf_out.astype(jnp.float32), y_ref, atol=1e-1, rtol=1e-1)

    # 4) bias=None path (no bias DMA / add in the kernel).
    y_nb = jax.block_until_ready(linear_norm(x, weight, None))
    assert jnp.allclose(y_nb, x @ weight.T, atol=1e-5, rtol=1e-5)

    print("KERNEL_OK")
</pallas_src>

<mosaic_0001>
module attributes {stable_mosaic.version = 11 : i64} {
  func.func @kernel(%arg0: i32, %arg1: i32, %arg2: i32, %arg3: memref<16x128xf32, #tpu.memory_space<vmem>>, %arg4: memref<128x128xf32, #tpu.memory_space<vmem>>, %arg5: memref<1x128xf32, #tpu.memory_space<vmem>>, %arg6: memref<16x128xf32, #tpu.memory_space<vmem>>) attributes {dimension_semantics = [#tpu.dimension_semantics<parallel>, #tpu.dimension_semantics<parallel>, #tpu.dimension_semantics<arbitrary>], iteration_bounds = array<i64: 1, 1, 1>, scalar_prefetch = 0 : i64, scratch_operands = 0 : i64, tpu.core_type = #tpu.core_type<tc>, window_params = [{transform_indices = @transform_0, window_bounds = array<i64: 16, 128>}, {transform_indices = @transform_1, window_bounds = array<i64: 128, 128>}, {transform_indices = @transform_2, window_bounds = array<i64: 1, 128>}, {transform_indices = @transform_3, window_bounds = array<i64: 16, 128>}]} {
    %c0_i32 = arith.constant 0 : i32
    %0 = arith.cmpi eq, %arg2, %c0_i32 : i32
    %1 = arith.extui %0 : i1 to i32
    %c0_i32_0 = arith.constant 0 : i32
    %2 = arith.cmpi ne, %1, %c0_i32_0 : i32
    scf.if %2 {
      %c0_8 = arith.constant 0 : index
      %c0_9 = arith.constant 0 : index
      %9 = vector.load %arg5[%c0_8, %c0_9] : memref<1x128xf32, #tpu.memory_space<vmem>>, vector<1x128xf32>
      %10 = vector.shape_cast %9 : vector<1x128xf32> to vector<1x128xf32>
      %11 = vector.broadcast %10 : vector<1x128xf32> to vector<16x128xf32>
      %c0_10 = arith.constant 0 : index
      %c0_11 = arith.constant 0 : index
      %12 = vector.load %arg6[%c0_10, %c0_11] : memref<16x128xf32, #tpu.memory_space<vmem>>, vector<16x128xf32>
      tpu.vector_store %arg6[%c0_10, %c0_11], %11 {strides = array<i32>} : memref<16x128xf32, #tpu.memory_space<vmem>>, vector<16x128xf32>,
    } else {
    }
    %c0 = arith.constant 0 : index
    %c0_1 = arith.constant 0 : index
    %3 = vector.load %arg6[%c0, %c0_1] : memref<16x128xf32, #tpu.memory_space<vmem>>, vector<16x128xf32>
    %c0_2 = arith.constant 0 : index
    %c0_3 = arith.constant 0 : index
    %4 = vector.load %arg3[%c0_2, %c0_3] : memref<16x128xf32, #tpu.memory_space<vmem>>, vector<16x128xf32>
    %c0_4 = arith.constant 0 : index
    %c0_5 = arith.constant 0 : index
    %5 = vector.load %arg4[%c0_4, %c0_5] : memref<128x128xf32, #tpu.memory_space<vmem>>, vector<128x128xf32>
    %cst = arith.constant dense<0.000000e+00> : vector<16x128xf32>
    %6 = tpu.matmul %4, %5, %cst {dimension_numbers = #tpu.dot_dimension_numbers<[1], [0], [0], [1], [0, 0, 1, 1], [], []>} : vector<16x128xf32>, vector<128x128xf32>, vector<16x128xf32> -> vector<16x128xf32>
    %7 = arith.addf %3, %6 : vector<16x128xf32>
    %c0_6 = arith.constant 0 : index
    %c0_7 = arith.constant 0 : index
    %8 = vector.load %arg6[%c0_6, %c0_7] : memref<16x128xf32, #tpu.memory_space<vmem>>, vector<16x128xf32>
    tpu.vector_store %arg6[%c0_6, %c0_7], %7 {strides = array<i32>} : memref<16x128xf32, #tpu.memory_space<vmem>>, vector<16x128xf32>,
    return
  }
  func.func @transform_0(%arg0: i32, %arg1: i32, %arg2: i32) -> (i32, i32) {
    %c0_i32 = arith.constant 0 : i32
    return %arg0, %arg2 : i32, i32
  }
  func.func @transform_1(%arg0: i32, %arg1: i32, %arg2: i32) -> (i32, i32) {
    %c0_i32 = arith.constant 0 : i32
    return %arg2, %arg1 : i32, i32
  }
  func.func @transform_2(%arg0: i32, %arg1: i32, %arg2: i32) -> (i32, i32) {
    %c0_i32 = arith.constant 0 : i32
    %c0_i32_0 = arith.constant 0 : i32
    return %c0_i32, %arg1 : i32, i32
  }
  func.func @transform_3(%arg0: i32, %arg1: i32, %arg2: i32) -> (i32, i32) {
    %c0_i32 = arith.constant 0 : i32
    return %arg0, %arg1 : i32, i32
  }
}

</mosaic_0001>

<llo_original>
// kernel: tpu_custom_call.1
$region0: #{tpu_custom_call.1}
  #allocation0 [shape = 'u32[]', space=smem, size = 0x4, offset = 0x4, fixed_abs, tag = 'smem constant byte address 0x4 - core index']
  #allocation1 [shape = 'u32[144,128]{1,0:T(1,128)}', space=vmem, size = 0x12000, scoped, tag = 'internal scratch']
  %s0 = inlined_call_operand.hbm [shape: f32[16,128], index: 0, kind: input, shape index: {}]
  %s1 = inlined_call_operand.hbm [shape: f32[128,128], index: 1, kind: input, shape index: {}]
  %s2 = inlined_call_operand.vmem [shape: f32[1,128], index: 2, kind: input, shape index: {}]
  %s3 = inlined_call_operand.hbm [shape: f32[16,128], index: 3, kind: output, shape index: {}]
  %s4 = sld [smem:[#allocation0]]
  $region34: #{tpu_custom_call.1} parent=0
    _
  %s6 = ssub.s32 1, %s4
  %s7 = scalar_select 0, %s6, %s4
  $region1: #{tpu_custom_call.1} parent=0
    #allocation2 [shape = 'u8[8192]{0}', space=vmem, size = 0x2000, scoped, tag = 'input window, operand 0, single buffered']
    #allocation3 [shape = 's32[1]{0}', space=sflag, size = 0x4, scoped, tag = 'scoped memory for tpu_custom_call.1']
    #allocation4 [shape = 's32[1]{0}', space=sflag, size = 0x4, scoped, tag = 'scoped memory for tpu_custom_call.1']
    #allocation5 [shape = 'u8[65536]{0}', space=vmem, size = 0x10000, scoped, tag = 'input window, operand 1, single buffered']
    #allocation6 [shape = 's32[1]{0}', space=sflag, size = 0x4, scoped, tag = 'scoped memory for tpu_custom_call.1']
    #allocation7 [shape = 'u8[8192]{0}', space=vmem, size = 0x2000, scoped, tag = 'output window, operand 0, single buffered']
    %8 = vsyncpa [#allocation3], 0
    %9 = vsyncpa [#allocation6], 0
    %10 = vsyncpa [#allocation4], 0
    // Predicated region
    $region2: #{tpu_custom_call.1} parent=1 // pred_check
      _
    $region3: #{tpu_custom_call.1} parent=1 // pred_check_branch
      %12 = sbr.rel (0) target = $region5
    $region4: #{tpu_custom_call.1} parent=1 // pred_region
      %s14 = ssub.s32 256, 256
      %15 = vsyncadd [#allocation3], %s14
      %s16 = sshll.u32 [#allocation2], 4
      %s17 = int_to_ptr.vmem [resolvable:$true] %s16
      %22 = dma.hbm_to_vmem [thread:$0]  %s0, 256, %s17, [#allocation3], 128, 128, 8
    $region5: #{tpu_custom_call.1} parent=1 // pred_fallthru
      _
    // Predicated region
    $region6: #{tpu_custom_call.1} parent=1 // pred_check
      _
    $region7: #{tpu_custom_call.1} parent=1 // pred_check_branch
      %24 = sbr.rel (0) target = $region9
    $region8: #{tpu_custom_call.1} parent=1 // pred_region
      %s26 = ssub.s32 2048, 2048
      %27 = vsyncadd [#allocation6], %s26
      %s28 = sshll.u32 [#allocation5], 4
      %s29 = int_to_ptr.vmem [resolvable:$true] %s28
      %34 = dma.hbm_to_vmem [thread:$0]  %s1, 2048, %s29, [#allocation6], 128, 128, 8
    $region9: #{tpu_custom_call.1} parent=1 // pred_fallthru
      _
    // Predicated region
    $region10: #{tpu_custom_call.1} parent=1 // pred_check
      _
    $region11: #{tpu_custom_call.1} parent=1 // pred_check_branch
      %36 = sbr.rel (0) target = $region13
    $region12: #{tpu_custom_call.1} parent=1 // pred_region
      _
    $region13: #{tpu_custom_call.1} parent=1 // pred_fallthru
      _
    // Predicated region
    $region14: #{tpu_custom_call.1} parent=1 // pred_check
      _
    $region15: #{tpu_custom_call.1} parent=1 // pred_check_branch
      %38 = sbr.rel (0) target = $region17
    $region16: #{tpu_custom_call.1} parent=1 // pred_region
      %39 = dma.done [#allocation3], 256
    $region17: #{tpu_custom_call.1} parent=1 // pred_fallthru
      _
    // Predicated region
    $region18: #{tpu_custom_call.1} parent=1 // pred_check
      _
    $region19: #{tpu_custom_call.1} parent=1 // pred_check_branch
      %41 = sbr.rel (0) target = $region21
    $region20: #{tpu_custom_call.1} parent=1 // pred_region
      %42 = dma.done [#allocation6], 2048
    $region21: #{tpu_custom_call.1} parent=1 // pred_fallthru
      _
    %p43 = scmp.eq.s32.totalorder 0, 0
    // Predicated region
    $region22: #{tpu_custom_call.1} parent=1 // pred_check
      %p44 = pneg %p43
    $region23: #{tpu_custom_call.1} parent=1 // pred_check_branch
      %46 = sbr.rel (%p44) target = $region25
    $region24: #{tpu_custom_call.1} parent=1 // pred_region
      %v47 = vld [vmem:[%s2] sm:$0x1]
      %v49 = vlaneseq
      %v50 = vshrl.u32 %v49, 7
      %v51 = vsub.s32 0, %v50
      %v52 = vrot.slane %v47, %v51
      %54 = vst [vmem:[#allocation7] sm:$0xff] %v52
      %55 = vst [vmem:[#allocation7 + $0x8] sm:$0xff] %v52
    $region25: #{tpu_custom_call.1} parent=1 // pred_fallthru
      _
    %v56 = vld [vmem:[#allocation7] sm:$0xff]
    %v57 = vld [vmem:[#allocation7 + $0x8] sm:$0xff]
    %v58 = vld [vmem:[#allocation2] sm:$0xff]
    %v59 = vld [vmem:[#allocation2 + $0x8] sm:$0xff]
    %v60 = vld [vmem:[#allocation5] sm:$0xff]
    %v61 = vld [vmem:[#allocation5 + $0x8] sm:$0xff]
    %v62 = vld [vmem:[#allocation5 + $0x10] sm:$0xff]
    %v63 = vld [vmem:[#allocation5 + $0x18] sm:$0xff]
    %v64 = vld [vmem:[#allocation5 + $0x20] sm:$0xff]
    %v65 = vld [vmem:[#allocation5 + $0x28] sm:$0xff]
    %v66 = vld [vmem:[#allocation5 + $0x30] sm:$0xff]
    %v67 = vld [vmem:[#allocation5 + $0x38] sm:$0xff]
    %v68 = vld [vmem:[#allocation5 + $0x40] sm:$0xff]
    %v69 = vld [vmem:[#allocation5 + $0x48] sm:$0xff]
    %v70 = vld [vmem:[#allocation5 + $0x50] sm:$0xff]
    %v71 = vld [vmem:[#allocation5 + $0x58] sm:$0xff]
    %v72 = vld [vmem:[#allocation5 + $0x60] sm:$0xff]
    %v73 = vld [vmem:[#allocation5 + $0x68] sm:$0xff]
    %v74 = vld [vmem:[#allocation5 + $0x70] sm:$0xff]
    %v75 = vld [vmem:[#allocation5 + $0x78] sm:$0xff]
    %76 = vmatprep.subr.mxu0 0.0
    %77 = vmatpush1.msra.mxu0 %v60
    %78 = vmatprep.subr.mxu0 0.0
    %79 = vmatpush1.msra.mxu0 %v61
    %80 = vmatprep.subr.mxu0 0.0
    %81 = vmatpush1.msra.mxu0 %v62
    %82 = vmatprep.subr.mxu0 0.0
    %83 = vmatpush1.msra.mxu0 %v63
    %84 = vmatprep.subr.mxu0 0.0
    %85 = vmatpush1.msra.mxu0 %v64
    %86 = vmatprep.subr.mxu0 0.0
    %87 = vmatpush1.msra.mxu0 %v65
    %88 = vmatprep.subr.mxu0 0.0
    %89 = vmatpush1.msra.mxu0 %v66
    %90 = vmatprep.subr.mxu0 0.0
    %91 = vmatpush1.msra.mxu0 %v67
    %92 = vmatprep.subr.mxu0 0.0
    %93 = vmatpush1.msra.mxu0 %v68
    %94 = vmatprep.subr.mxu0 0.0
    %95 = vmatpush1.msra.mxu0 %v69
    %96 = vmatprep.subr.mxu0 0.0
    %97 = vmatpush1.msra.mxu0 %v70
    %98 = vmatprep.subr.mxu0 0.0
    %99 = vmatpush1.msra.mxu0 %v71
    %100 = vmatprep.subr.mxu0 0.0
    %101 = vmatpush1.msra.mxu0 %v72
    %102 = vmatprep.subr.mxu0 0.0
    %103 = vmatpush1.msra.mxu0 %v73
    %104 = vmatprep.subr.mxu0 0.0
    %105 = vmatpush1.msra.mxu0 %v74
    %106 = vmatprep.subr.mxu0 0.0
    %107 = vmatpush1.msra.mxu0 %v75
    %108 = vmatprep.subr.mxu0 0.0
    %109 = vmatpush1.msra.mxu0 0.0
    %110 = vmatprep.subr.mxu0 0.0
    %111 = vmatpush1.msra.mxu0 0.0
    %112 = vmatprep.subr.mxu0 0.0
    %113 = vmatpush1.msra.mxu0 0.0
    %114 = vmatprep.subr.mxu0 0.0
    %115 = vmatpush1.msra.mxu0 0.0
    %116 = vmatprep.subr.mxu0 0.0
    %117 = vmatpush1.msra.mxu0 0.0
    %118 = vmatprep.subr.mxu0 0.0
    %119 = vmatpush1.msra.mxu0 0.0
    %120 = vmatprep.subr.mxu0 0.0
    %121 = vmatpush1.msra.mxu0 0.0
    %122 = vmatprep.subr.mxu0 0.0
    %123 = vmatpush1.msra.mxu0 0.0
    %124 = vmatprep.subr.mxu0 0.0
    %125 = vmatpush1.msra.mxu0 0.0
    %126 = vmatprep.subr.mxu0 0.0
    %127 = vmatpush1.msra.mxu0 0.0
    %128 = vmatprep.subr.mxu0 0.0
    %129 = vmatpush1.msra.mxu0 0.0
    %130 = vmatprep.subr.mxu0 0.0
    %131 = vmatpush1.msra.mxu0 0.0
    %132 = vmatprep.subr.mxu0 0.0
    %133 = vmatpush1.msra.mxu0 0.0
    %134 = vmatprep.subr.mxu0 0.0
    %135 = vmatpush1.msra.mxu0 0.0
    %136 = vmatprep.subr.mxu0 0.0
    %137 = vmatpush1.msra.mxu0 0.0
    %138 = vmatprep.subr.mxu0 0.0
    %139 = vmatpush1.msra.mxu0 0.0
    %140 = vmatprep.mubr.f32.mxu0 0.0
    %141 = vmatmul.mubr.f32.gmra.mrb[0].mxu0 %v58
    %v142 = vpop.f32.mrb[0].mxu0
    %v143 = vadd.f32 0.0, %v142
    %v144 = vpop.f32.mrb[0].mxu0
    %145 = vmatprep.mubr.f32.mxu0 0.0
    %146 = vmatmul.mubr.f32.gmra.mrb[0].mxu0 %v59
    %v147 = vpop.f32.mrb[0].mxu0
    %v148 = vadd.f32 0.0, %v147
    %v149 = vpop.f32.mrb[0].mxu0
    %150 = vdwg.mxu0
    %v151 = vadd.f32 %v56, %v143
    %v152 = vadd.f32 %v57, %v148
    %153 = vst [vmem:[#allocation7] sm:$0xff] %v151
    %154 = vst [vmem:[#allocation7 + $0x8] sm:$0xff] %v152
    // Predicated region
    $region26: #{tpu_custom_call.1} parent=1 // pred_check
      _
    $region27: #{tpu_custom_call.1} parent=1 // pred_check_branch
      %156 = sbr.rel (0) target = $region29
    $region28: #{tpu_custom_call.1} parent=1 // pred_region
      %s158 = ssub.s32 256, 256
      %159 = vsyncadd [#allocation4], %s158
      %s160 = sshll.u32 [#allocation7], 4
      %s161 = int_to_ptr.vmem [resolvable:$true] %s160
      %166 = dma.vmem_to_hbm [thread:$0]  %s161, 256, %s3, [#allocation4], 128, 128, 8
    $region29: #{tpu_custom_call.1} parent=1 // pred_fallthru
      _
    // Predicated region
    $region30: #{tpu_custom_call.1} parent=1 // pred_check
      _
    $region31: #{tpu_custom_call.1} parent=1 // pred_check_branch
      %168 = sbr.rel (0) target = $region33
    $region32: #{tpu_custom_call.1} parent=1 // pred_region
      %169 = dma.done [#allocation4], 256
    $region33: #{tpu_custom_call.1} parent=1 // pred_fallthru
      _
    %170 = vsyncpa [#allocation3], 1
    %171 = vsyncpa [#allocation6], 1
    %172 = vsyncpa [#allocation4], 1

</llo_original>
